<compile_context>
chip_gen: v6e
topology: v6e:2x2x1
jax: 0.10.0
libtpu: 0.0.40
codegen_flags: <defaults>
</compile_context>

<pallas_src>
import math

import jax
import jax.numpy as jnp
from jax.experimental import pallas as pl
from jax.experimental.pallas import tpu as pltpu

HIDDEN = 50          # per-layer hidden size (PyTorch)
OUT = 10             # fc output size
HP = 64              # hidden padded to a clean lane block
HP3 = 3 * HP         # fused state width  [h1 | h2 | h3]

# Packed-blob row layout (all rows 8-aligned).
W1_ROW = HP3                 # 192      : Wih1^T (input_size == 1 -> one row)
BIAS_ROW = W1_ROW + 8        # 200..202 : warm-up-masked bias schedule
WFC_ROW = BIAS_ROW + 8       # 208..399 : (192,192) padded fc weight block
BFC_ROW = WFC_ROW + HP3      # 400      : fc bias (lanes 0..9)
BLOB_ROWS = BFC_ROW + 8      # 408


def _rnn_kernel(x_ref, blob_ref, out_ref):
    """x_ref: (B, T+2) f32, blob_ref: (BLOB_ROWS, 192) f32, out_ref: (B, OUT)."""
    B, t_pad = x_ref.shape           # t_pad = T + 2 (2 wavefront drain steps)

    xs = x_ref[...]                  # tiny (B, T+2); ~1 vreg
    state = jnp.zeros((B, HP3), jnp.float32)

    # t_pad is static & small -> fully unroll; one fused matmul->tanh per step
    # is the entire recurrence critical path (T+2 dependent stages).
    for s in range(t_pad):
        bi = BIAS_ROW + min(s, 2)
        # Layer-1 input projection + warm-up-masked biases: depends only on x
        # and loop-invariant rows, so it schedules off the critical path.
        add = (xs[:, s:s + 1] * blob_ref[W1_ROW:W1_ROW + 1, :]
               + blob_ref[bi:bi + 1, :])
        # Block weight loaded at point of use (not hoisted) to keep vreg
        # pressure off the unrolled chain.
        state = jnp.tanh(
            jnp.dot(state, blob_ref[0:HP3, :],
                    preferred_element_type=jnp.float32) + add)

    # fc head: state block 2 now holds h3(T-1); the fc weight block was
    # pre-placed so no lane slicing of the state is needed before the matmul.
    logits = (jnp.dot(state, blob_ref[WFC_ROW:WFC_ROW + HP3, :],
                      preferred_element_type=jnp.float32)
              + blob_ref[BFC_ROW:BFC_ROW + 1, :])
    out_ref[...] = logits[:, 0:OUT].astype(out_ref.dtype)


@jax.jit
def rnn_model2_forward(x, blob):
    """x: (B, T, 1) float32, blob: packed params -> (B, OUT) float32."""
    B = x.shape[0]
    # Squeeze the size-1 feature dim and append 2 zero "drain" steps for the
    # wavefront (h2/h3 lag 1/2 steps behind h1).
    x_bt = jnp.pad(x[:, :, 0], ((0, 0), (0, 2)))          # (B, T + 2)
    vmem = pl.BlockSpec(memory_space=pltpu.MemorySpace.VMEM)
    # TODO(synk): optional nonzero initial hidden states (h1/h2/h3 forward
    # args) are assumed zero (the PyTorch default call); plumb them through
    # the initial fused state if ever needed.
    # TODO(synk): only add a batch grid + dimension_semantics=("parallel",)
    # (2 TCs on v7x) once B >= ~16; at B=2 it buys nothing.
    return pl.pallas_call(
        _rnn_kernel,
        out_shape=jax.ShapeDtypeStruct((B, OUT), jnp.float32),
        in_specs=[vmem, vmem],
        out_specs=vmem,
    )(x_bt, blob)


def _xavier_normal(key, shape):
    # PyTorch xavier_normal_: std = sqrt(2/(fan_in+fan_out)), weight (out, in).
    fan_out, fan_in = shape
    std = math.sqrt(2.0 / (fan_in + fan_out))
    return std * jax.random.normal(key, shape, dtype=jnp.float32)


def init_params(key):
    """PyTorch-layout params: weight_ih (H,in), weight_hh (H,H), fc (OUT,H)."""
    k = jax.random.split(key, 7)
    zH = jnp.zeros((HIDDEN,), jnp.float32)
    return {
        "w_ih1": _xavier_normal(k[0], (HIDDEN, 1)),
        "w_hh1": _xavier_normal(k[1], (HIDDEN, HIDDEN)),
        "b_ih1": zH, "b_hh1": zH,
        "w_ih2": _xavier_normal(k[2], (HIDDEN, HIDDEN)),
        "w_hh2": _xavier_normal(k[3], (HIDDEN, HIDDEN)),
        "b_ih2": zH, "b_hh2": zH,
        "w_ih3": _xavier_normal(k[4], (HIDDEN, HIDDEN)),
        "w_hh3": _xavier_normal(k[5], (HIDDEN, HIDDEN)),
        "b_ih3": zH, "b_hh3": zH,
        "w_fc": _xavier_normal(k[6], (OUT, HIDDEN)),
        "b_fc": jnp.zeros((OUT,), jnp.float32),
    }


def pack_params(p):
    """One-time packing of all weights/biases into a single VMEM-friendly blob."""
    f32 = jnp.float32
    h, hp = HIDDEN, HP
    # Keep b_ih and b_hh separate in the raw params; sum here (correct for
    # arbitrary, not just zero, biases).
    b1 = p["b_ih1"] + p["b_hh1"]
    b2 = p["b_ih2"] + p["b_hh2"]
    b3 = p["b_ih3"] + p["b_hh3"]

    # Wavefront block weight: output column block j is fed only by the input
    # blocks its cell reads; state layout is [h1 | h2 | h3], each padded to Hp.
    w_block = jnp.zeros((HP3, HP3), f32)
    w_block = w_block.at[0:h, 0:h].set(p["w_hh1"].T)                              # h1 <- h1
    w_block = w_block.at[0:h, hp:hp + h].set(p["w_ih2"].T)                        # h2 <- h1
    w_block = w_block.at[hp:hp + h, hp:hp + h].set(p["w_hh2"].T)                  # h2 <- h2
    w_block = w_block.at[hp:hp + h, 2 * hp:2 * hp + h].set(p["w_ih3"].T)          # h3 <- h2
    w_block = w_block.at[2 * hp:2 * hp + h, 2 * hp:2 * hp + h].set(p["w_hh3"].T)  # h3 <- h3

    wih1_row = jnp.zeros((HP3,), f32).at[0:h].set(p["w_ih1"][:, 0])

    # Warm-up-masked bias schedule: s=0 -> [b1|0|0], s=1 -> [b1|b2|0],
    # s>=2 -> [b1|b2|b3]; keeps the wavefront exact for nonzero biases.
    bias0 = jnp.zeros((HP3,), f32).at[0:h].set(b1)
    bias1 = bias0.at[hp:hp + h].set(b2)
    bias2 = bias1.at[2 * hp:2 * hp + h].set(b3)

    # fc head placed against the full fused state (block 2 = h3).
    wfc_block = jnp.zeros((HP3, HP3), f32)
    wfc_block = wfc_block.at[2 * hp:2 * hp + h, 0:OUT].set(p["w_fc"].T)
    bfc_row = jnp.zeros((HP3,), f32).at[0:OUT].set(p["b_fc"])

    blob = jnp.zeros((BLOB_ROWS, HP3), f32)
    blob = blob.at[0:HP3, :].set(w_block)
    blob = blob.at[W1_ROW, :].set(wih1_row)
    blob = blob.at[BIAS_ROW + 0, :].set(bias0)
    blob = blob.at[BIAS_ROW + 1, :].set(bias1)
    blob = blob.at[BIAS_ROW + 2, :].set(bias2)
    blob = blob.at[WFC_ROW:WFC_ROW + HP3, :].set(wfc_block)
    blob = blob.at[BFC_ROW, :].set(bfc_row)
    return blob


def _reference_forward(x, p):
    """Pure-JAX reference of the PyTorch forward, for correctness checks."""
    B, T, _ = x.shape
    h1 = h2 = h3 = jnp.zeros((B, HIDDEN), jnp.float32)
    for t in range(T):
        x_t = x[:, t]  # (B, 1)
        h1 = jnp.tanh(x_t @ p["w_ih1"].T + h1 @ p["w_hh1"].T + p["b_ih1"] + p["b_hh1"])
        h2 = jnp.tanh(h1 @ p["w_ih2"].T + h2 @ p["w_hh2"].T + p["b_ih2"] + p["b_hh2"])
        h3 = jnp.tanh(h2 @ p["w_ih3"].T + h3 @ p["w_hh3"].T + p["b_ih3"] + p["b_hh3"])
    return h3 @ p["w_fc"].T + p["b_fc"]


if __name__ == "__main__":
    key = jax.random.PRNGKey(0)
    k_param, k_x, k_b = jax.random.split(key, 3)

    B, T = 2, 8
    x = jax.random.normal(k_x, (B, T, 1), dtype=jnp.float32)  # (batch, seq, 1)

    params = init_params(k_param)
    blob = pack_params(params)

    out = jax.block_until_ready(rnn_model2_forward(x, blob))
    ref = _reference_forward(x, params)
    assert out.shape == (B, OUT)
    assert jnp.allclose(out, ref, atol=1e-4, rtol=1e-4), "mismatch vs pure-JAX reference"

    # Extra check: nonzero biases exercise the wavefront warm-up bias masking.
    params_nz = dict(params)
    kb = jax.random.split(k_b, 7)
    for i, name in enumerate(["b_ih1", "b_hh1", "b_ih2", "b_hh2", "b_ih3", "b_hh3", "b_fc"]):
        params_nz[name] = 0.1 * jax.random.normal(kb[i], params[name].shape, jnp.float32)
    out2 = jax.block_until_ready(rnn_model2_forward(x, pack_params(params_nz)))
    ref2 = _reference_forward(x, params_nz)
    assert jnp.allclose(out2, ref2, atol=1e-4, rtol=1e-4), "mismatch with nonzero biases"

    print("KERNEL_OK")
</pallas_src>

<mosaic_0001>
module attributes {stable_mosaic.version = 11 : i64} {
  func.func @_rnn_kernel(%arg0: memref<2x10xf32, #tpu.memory_space<vmem>>, %arg1: memref<408x192xf32, #tpu.memory_space<vmem>>, %arg2: memref<2x10xf32, #tpu.memory_space<vmem>>) attributes {dimension_semantics = [], scalar_prefetch = 0 : i64, scratch_operands = 0 : i64, tpu.core_type = #tpu.core_type<tc>} {
    %c0 = arith.constant 0 : index
    %c0_0 = arith.constant 0 : index
    %0 = vector.load %arg0[%c0, %c0_0] : memref<2x10xf32, #tpu.memory_space<vmem>>, vector<2x10xf32>
    %cst = arith.constant 0.000000e+00 : f32
    %1 = vector.broadcast %cst : f32 to vector<2x192xf32>
    %2 = vector.extract_strided_slice %0 {offsets = [0, 0], sizes = [2, 1], strides = [1, 1]} : vector<2x10xf32> to vector<2x1xf32>
    %c192 = arith.constant 192 : index
    %c0_1 = arith.constant 0 : index
    %3 = vector.load %arg1[%c192, %c0_1] : memref<408x192xf32, #tpu.memory_space<vmem>>, vector<1x192xf32>
    %4 = vector.broadcast %2 : vector<2x1xf32> to vector<2x192xf32>
    %5 = vector.broadcast %3 : vector<1x192xf32> to vector<2x192xf32>
    %6 = arith.mulf %4, %5 : vector<2x192xf32>
    %c200 = arith.constant 200 : index
    %c0_2 = arith.constant 0 : index
    %7 = vector.load %arg1[%c200, %c0_2] : memref<408x192xf32, #tpu.memory_space<vmem>>, vector<1x192xf32>
    %8 = vector.broadcast %7 : vector<1x192xf32> to vector<2x192xf32>
    %9 = arith.addf %6, %8 : vector<2x192xf32>
    %c0_3 = arith.constant 0 : index
    %c0_4 = arith.constant 0 : index
    %10 = vector.load %arg1[%c0_3, %c0_4] : memref<408x192xf32, #tpu.memory_space<vmem>>, vector<192x192xf32>
    %cst_5 = arith.constant dense<0.000000e+00> : vector<2x192xf32>
    %11 = tpu.matmul %1, %10, %cst_5 {dimension_numbers = #tpu.dot_dimension_numbers<[1], [0], [0], [1], [0, 0, 1, 1], [], []>} : vector<2x192xf32>, vector<192x192xf32>, vector<2x192xf32> -> vector<2x192xf32>
    %12 = arith.addf %11, %9 : vector<2x192xf32>
    %13 = math.tanh %12 : vector<2x192xf32>
    %14 = vector.extract_strided_slice %0 {offsets = [0, 1], sizes = [2, 1], strides = [1, 1]} : vector<2x10xf32> to vector<2x1xf32>
    %c192_6 = arith.constant 192 : index
    %c0_7 = arith.constant 0 : index
    %15 = vector.load %arg1[%c192_6, %c0_7] : memref<408x192xf32, #tpu.memory_space<vmem>>, vector<1x192xf32>
    %16 = vector.broadcast %14 : vector<2x1xf32> to vector<2x192xf32>
    %17 = vector.broadcast %15 : vector<1x192xf32> to vector<2x192xf32>
    %18 = arith.mulf %16, %17 : vector<2x192xf32>
    %c201 = arith.constant 201 : index
    %c0_8 = arith.constant 0 : index
    %19 = vector.load %arg1[%c201, %c0_8] : memref<408x192xf32, #tpu.memory_space<vmem>>, vector<1x192xf32>
    %20 = vector.broadcast %19 : vector<1x192xf32> to vector<2x192xf32>
    %21 = arith.addf %18, %20 : vector<2x192xf32>
    %c0_9 = arith.constant 0 : index
    %c0_10 = arith.constant 0 : index
    %22 = vector.load %arg1[%c0_9, %c0_10] : memref<408x192xf32, #tpu.memory_space<vmem>>, vector<192x192xf32>
    %cst_11 = arith.constant dense<0.000000e+00> : vector<2x192xf32>
    %23 = tpu.matmul %13, %22, %cst_11 {dimension_numbers = #tpu.dot_dimension_numbers<[1], [0], [0], [1], [0, 0, 1, 1], [], []>} : vector<2x192xf32>, vector<192x192xf32>, vector<2x192xf32> -> vector<2x192xf32>
    %24 = arith.addf %23, %21 : vector<2x192xf32>
    %25 = math.tanh %24 : vector<2x192xf32>
    %26 = vector.extract_strided_slice %0 {offsets = [0, 2], sizes = [2, 1], strides = [1, 1]} : vector<2x10xf32> to vector<2x1xf32>
    %c192_12 = arith.constant 192 : index
    %c0_13 = arith.constant 0 : index
    %27 = vector.load %arg1[%c192_12, %c0_13] : memref<408x192xf32, #tpu.memory_space<vmem>>, vector<1x192xf32>
    %28 = vector.broadcast %26 : vector<2x1xf32> to vector<2x192xf32>
    %29 = vector.broadcast %27 : vector<1x192xf32> to vector<2x192xf32>
    %30 = arith.mulf %28, %29 : vector<2x192xf32>
    %c202 = arith.constant 202 : index
    %c0_14 = arith.constant 0 : index
    %31 = vector.load %arg1[%c202, %c0_14] : memref<408x192xf32, #tpu.memory_space<vmem>>, vector<1x192xf32>
    %32 = vector.broadcast %31 : vector<1x192xf32> to vector<2x192xf32>
    %33 = arith.addf %30, %32 : vector<2x192xf32>
    %c0_15 = arith.constant 0 : index
    %c0_16 = arith.constant 0 : index
    %34 = vector.load %arg1[%c0_15, %c0_16] : memref<408x192xf32, #tpu.memory_space<vmem>>, vector<192x192xf32>
    %cst_17 = arith.constant dense<0.000000e+00> : vector<2x192xf32>
    %35 = tpu.matmul %25, %34, %cst_17 {dimension_numbers = #tpu.dot_dimension_numbers<[1], [0], [0], [1], [0, 0, 1, 1], [], []>} : vector<2x192xf32>, vector<192x192xf32>, vector<2x192xf32> -> vector<2x192xf32>
    %36 = arith.addf %35, %33 : vector<2x192xf32>
    %37 = math.tanh %36 : vector<2x192xf32>
    %38 = vector.extract_strided_slice %0 {offsets = [0, 3], sizes = [2, 1], strides = [1, 1]} : vector<2x10xf32> to vector<2x1xf32>
    %c192_18 = arith.constant 192 : index
    %c0_19 = arith.constant 0 : index
    %39 = vector.load %arg1[%c192_18, %c0_19] : memref<408x192xf32, #tpu.memory_space<vmem>>, vector<1x192xf32>
    %40 = vector.broadcast %38 : vector<2x1xf32> to vector<2x192xf32>
    %41 = vector.broadcast %39 : vector<1x192xf32> to vector<2x192xf32>
    %42 = arith.mulf %40, %41 : vector<2x192xf32>
    %c202_20 = arith.constant 202 : index
    %c0_21 = arith.constant 0 : index
    %43 = vector.load %arg1[%c202_20, %c0_21] : memref<408x192xf32, #tpu.memory_space<vmem>>, vector<1x192xf32>
    %44 = vector.broadcast %43 : vector<1x192xf32> to vector<2x192xf32>
    %45 = arith.addf %42, %44 : vector<2x192xf32>
    %c0_22 = arith.constant 0 : index
    %c0_23 = arith.constant 0 : index
    %46 = vector.load %arg1[%c0_22, %c0_23] : memref<408x192xf32, #tpu.memory_space<vmem>>, vector<192x192xf32>
    %cst_24 = arith.constant dense<0.000000e+00> : vector<2x192xf32>
    %47 = tpu.matmul %37, %46, %cst_24 {dimension_numbers = #tpu.dot_dimension_numbers<[1], [0], [0], [1], [0, 0, 1, 1], [], []>} : vector<2x192xf32>, vector<192x192xf32>, vector<2x192xf32> -> vector<2x192xf32>
    %48 = arith.addf %47, %45 : vector<2x192xf32>
    %49 = math.tanh %48 : vector<2x192xf32>
    %50 = vector.extract_strided_slice %0 {offsets = [0, 4], sizes = [2, 1], strides = [1, 1]} : vector<2x10xf32> to vector<2x1xf32>
    %c192_25 = arith.constant 192 : index
    %c0_26 = arith.constant 0 : index
    %51 = vector.load %arg1[%c192_25, %c0_26] : memref<408x192xf32, #tpu.memory_space<vmem>>, vector<1x192xf32>
    %52 = vector.broadcast %50 : vector<2x1xf32> to vector<2x192xf32>
    %53 = vector.broadcast %51 : vector<1x192xf32> to vector<2x192xf32>
    %54 = arith.mulf %52, %53 : vector<2x192xf32>
    %c202_27 = arith.constant 202 : index
    %c0_28 = arith.constant 0 : index
    %55 = vector.load %arg1[%c202_27, %c0_28] : memref<408x192xf32, #tpu.memory_space<vmem>>, vector<1x192xf32>
    %56 = vector.broadcast %55 : vector<1x192xf32> to vector<2x192xf32>
    %57 = arith.addf %54, %56 : vector<2x192xf32>
    %c0_29 = arith.constant 0 : index
    %c0_30 = arith.constant 0 : index
    %58 = vector.load %arg1[%c0_29, %c0_30] : memref<408x192xf32, #tpu.memory_space<vmem>>, vector<192x192xf32>
    %cst_31 = arith.constant dense<0.000000e+00> : vector<2x192xf32>
    %59 = tpu.matmul %49, %58, %cst_31 {dimension_numbers = #tpu.dot_dimension_numbers<[1], [0], [0], [1], [0, 0, 1, 1], [], []>} : vector<2x192xf32>, vector<192x192xf32>, vector<2x192xf32> -> vector<2x192xf32>
    %60 = arith.addf %59, %57 : vector<2x192xf32>
    %61 = math.tanh %60 : vector<2x192xf32>
    %62 = vector.extract_strided_slice %0 {offsets = [0, 5], sizes = [2, 1], strides = [1, 1]} : vector<2x10xf32> to vector<2x1xf32>
    %c192_32 = arith.constant 192 : index
    %c0_33 = arith.constant 0 : index
    %63 = vector.load %arg1[%c192_32, %c0_33] : memref<408x192xf32, #tpu.memory_space<vmem>>, vector<1x192xf32>
    %64 = vector.broadcast %62 : vector<2x1xf32> to vector<2x192xf32>
    %65 = vector.broadcast %63 : vector<1x192xf32> to vector<2x192xf32>
    %66 = arith.mulf %64, %65 : vector<2x192xf32>
    %c202_34 = arith.constant 202 : index
    %c0_35 = arith.constant 0 : index
    %67 = vector.load %arg1[%c202_34, %c0_35] : memref<408x192xf32, #tpu.memory_space<vmem>>, vector<1x192xf32>
    %68 = vector.broadcast %67 : vector<1x192xf32> to vector<2x192xf32>
    %69 = arith.addf %66, %68 : vector<2x192xf32>
    %c0_36 = arith.constant 0 : index
    %c0_37 = arith.constant 0 : index
    %70 = vector.load %arg1[%c0_36, %c0_37] : memref<408x192xf32, #tpu.memory_space<vmem>>, vector<192x192xf32>
    %cst_38 = arith.constant dense<0.000000e+00> : vector<2x192xf32>
    %71 = tpu.matmul %61, %70, %cst_38 {dimension_numbers = #tpu.dot_dimension_numbers<[1], [0], [0], [1], [0, 0, 1, 1], [], []>} : vector<2x192xf32>, vector<192x192xf32>, vector<2x192xf32> -> vector<2x192xf32>
    %72 = arith.addf %71, %69 : vector<2x192xf32>
    %73 = math.tanh %72 : vector<2x192xf32>
    %74 = vector.extract_strided_slice %0 {offsets = [0, 6], sizes = [2, 1], strides = [1, 1]} : vector<2x10xf32> to vector<2x1xf32>
    %c192_39 = arith.constant 192 : index
    %c0_40 = arith.constant 0 : index
    %75 = vector.load %arg1[%c192_39, %c0_40] : memref<408x192xf32, #tpu.memory_space<vmem>>, vector<1x192xf32>
    %76 = vector.broadcast %74 : vector<2x1xf32> to vector<2x192xf32>
    %77 = vector.broadcast %75 : vector<1x192xf32> to vector<2x192xf32>
    %78 = arith.mulf %76, %77 : vector<2x192xf32>
    %c202_41 = arith.constant 202 : index
    %c0_42 = arith.constant 0 : index
    %79 = vector.load %arg1[%c202_41, %c0_42] : memref<408x192xf32, #tpu.memory_space<vmem>>, vector<1x192xf32>
    %80 = vector.broadcast %79 : vector<1x192xf32> to vector<2x192xf32>
    %81 = arith.addf %78, %80 : vector<2x192xf32>
    %c0_43 = arith.constant 0 : index
    %c0_44 = arith.constant 0 : index
    %82 = vector.load %arg1[%c0_43, %c0_44] : memref<408x192xf32, #tpu.memory_space<vmem>>, vector<192x192xf32>
    %cst_45 = arith.constant dense<0.000000e+00> : vector<2x192xf32>
    %83 = tpu.matmul %73, %82, %cst_45 {dimension_numbers = #tpu.dot_dimension_numbers<[1], [0], [0], [1], [0, 0, 1, 1], [], []>} : vector<2x192xf32>, vector<192x192xf32>, vector<2x192xf32> -> vector<2x192xf32>
    %84 = arith.addf %83, %81 : vector<2x192xf32>
    %85 = math.tanh %84 : vector<2x192xf32>
    %86 = vector.extract_strided_slice %0 {offsets = [0, 7], sizes = [2, 1], strides = [1, 1]} : vector<2x10xf32> to vector<2x1xf32>
    %c192_46 = arith.constant 192 : index
    %c0_47 = arith.constant 0 : index
    %87 = vector.load %arg1[%c192_46, %c0_47] : memref<408x192xf32, #tpu.memory_space<vmem>>, vector<1x192xf32>
    %88 = vector.broadcast %86 : vector<2x1xf32> to vector<2x192xf32>
    %89 = vector.broadcast %87 : vector<1x192xf32> to vector<2x192xf32>
    %90 = arith.mulf %88, %89 : vector<2x192xf32>
    %c202_48 = arith.constant 202 : index
    %c0_49 = arith.constant 0 : index
    %91 = vector.load %arg1[%c202_48, %c0_49] : memref<408x192xf32, #tpu.memory_space<vmem>>, vector<1x192xf32>
    %92 = vector.broadcast %91 : vector<1x192xf32> to vector<2x192xf32>
    %93 = arith.addf %90, %92 : vector<2x192xf32>
    %c0_50 = arith.constant 0 : index
    %c0_51 = arith.constant 0 : index
    %94 = vector.load %arg1[%c0_50, %c0_51] : memref<408x192xf32, #tpu.memory_space<vmem>>, vector<192x192xf32>
    %cst_52 = arith.constant dense<0.000000e+00> : vector<2x192xf32>
    %95 = tpu.matmul %85, %94, %cst_52 {dimension_numbers = #tpu.dot_dimension_numbers<[1], [0], [0], [1], [0, 0, 1, 1], [], []>} : vector<2x192xf32>, vector<192x192xf32>, vector<2x192xf32> -> vector<2x192xf32>
    %96 = arith.addf %95, %93 : vector<2x192xf32>
    %97 = math.tanh %96 : vector<2x192xf32>
    %98 = vector.extract_strided_slice %0 {offsets = [0, 8], sizes = [2, 1], strides = [1, 1]} : vector<2x10xf32> to vector<2x1xf32>
    %c192_53 = arith.constant 192 : index
    %c0_54 = arith.constant 0 : index
    %99 = vector.load %arg1[%c192_53, %c0_54] : memref<408x192xf32, #tpu.memory_space<vmem>>, vector<1x192xf32>
    %100 = vector.broadcast %98 : vector<2x1xf32> to vector<2x192xf32>
    %101 = vector.broadcast %99 : vector<1x192xf32> to vector<2x192xf32>
    %102 = arith.mulf %100, %101 : vector<2x192xf32>
    %c202_55 = arith.constant 202 : index
    %c0_56 = arith.constant 0 : index
    %103 = vector.load %arg1[%c202_55, %c0_56] : memref<408x192xf32, #tpu.memory_space<vmem>>, vector<1x192xf32>
    %104 = vector.broadcast %103 : vector<1x192xf32> to vector<2x192xf32>
    %105 = arith.addf %102, %104 : vector<2x192xf32>
    %c0_57 = arith.constant 0 : index
    %c0_58 = arith.constant 0 : index
    %106 = vector.load %arg1[%c0_57, %c0_58] : memref<408x192xf32, #tpu.memory_space<vmem>>, vector<192x192xf32>
    %cst_59 = arith.constant dense<0.000000e+00> : vector<2x192xf32>
    %107 = tpu.matmul %97, %106, %cst_59 {dimension_numbers = #tpu.dot_dimension_numbers<[1], [0], [0], [1], [0, 0, 1, 1], [], []>} : vector<2x192xf32>, vector<192x192xf32>, vector<2x192xf32> -> vector<2x192xf32>
    %108 = arith.addf %107, %105 : vector<2x192xf32>
    %109 = math.tanh %108 : vector<2x192xf32>
    %110 = vector.extract_strided_slice %0 {offsets = [0, 9], sizes = [2, 1], strides = [1, 1]} : vector<2x10xf32> to vector<2x1xf32>
    %c192_60 = arith.constant 192 : index
    %c0_61 = arith.constant 0 : index
    %111 = vector.load %arg1[%c192_60, %c0_61] : memref<408x192xf32, #tpu.memory_space<vmem>>, vector<1x192xf32>
    %112 = vector.broadcast %110 : vector<2x1xf32> to vector<2x192xf32>
    %113 = vector.broadcast %111 : vector<1x192xf32> to vector<2x192xf32>
    %114 = arith.mulf %112, %113 : vector<2x192xf32>
    %c202_62 = arith.constant 202 : index
    %c0_63 = arith.constant 0 : index
    %115 = vector.load %arg1[%c202_62, %c0_63] : memref<408x192xf32, #tpu.memory_space<vmem>>, vector<1x192xf32>
    %116 = vector.broadcast %115 : vector<1x192xf32> to vector<2x192xf32>
    %117 = arith.addf %114, %116 : vector<2x192xf32>
    %c0_64 = arith.constant 0 : index
    %c0_65 = arith.constant 0 : index
    %118 = vector.load %arg1[%c0_64, %c0_65] : memref<408x192xf32, #tpu.memory_space<vmem>>, vector<192x192xf32>
    %cst_66 = arith.constant dense<0.000000e+00> : vector<2x192xf32>
    %119 = tpu.matmul %109, %118, %cst_66 {dimension_numbers = #tpu.dot_dimension_numbers<[1], [0], [0], [1], [0, 0, 1, 1], [], []>} : vector<2x192xf32>, vector<192x192xf32>, vector<2x192xf32> -> vector<2x192xf32>
    %120 = arith.addf %119, %117 : vector<2x192xf32>
    %121 = math.tanh %120 : vector<2x192xf32>
    %c208 = arith.constant 208 : index
    %c0_67 = arith.constant 0 : index
    %122 = vector.load %arg1[%c208, %c0_67] : memref<408x192xf32, #tpu.memory_space<vmem>>, vector<192x192xf32>
    %cst_68 = arith.constant dense<0.000000e+00> : vector<2x192xf32>
    %123 = tpu.matmul %121, %122, %cst_68 {dimension_numbers = #tpu.dot_dimension_numbers<[1], [0], [0], [1], [0, 0, 1, 1], [], []>} : vector<2x192xf32>, vector<192x192xf32>, vector<2x192xf32> -> vector<2x192xf32>
    %c400 = arith.constant 400 : index
    %c0_69 = arith.constant 0 : index
    %124 = vector.load %arg1[%c400, %c0_69] : memref<408x192xf32, #tpu.memory_space<vmem>>, vector<1x192xf32>
    %125 = vector.broadcast %124 : vector<1x192xf32> to vector<2x192xf32>
    %126 = arith.addf %123, %125 : vector<2x192xf32>
    %127 = vector.extract_strided_slice %126 {offsets = [0, 0], sizes = [2, 10], strides = [1, 1]} : vector<2x192xf32> to vector<2x10xf32>
    %c0_70 = arith.constant 0 : index
    %c0_71 = arith.constant 0 : index
    %128 = vector.load %arg2[%c0_70, %c0_71] : memref<2x10xf32, #tpu.memory_space<vmem>>, vector<2x10xf32>
    tpu.vector_store %arg2[%c0_70, %c0_71], %127 {strides = array<i32>} : memref<2x10xf32, #tpu.memory_space<vmem>>, vector<2x10xf32>,
    return
  }
}

</mosaic_0001>

<llo_original>
// kernel: rnn_model2_forward.1
$region0: #{rnn_model2_forward.1}
  #allocation0 [shape = 'u32[]', space=smem, size = 0x4, offset = 0x4, fixed_abs, tag = 'smem constant byte address 0x4 - core index']
  #allocation1 [shape = 'u32[144,128]{1,0:T(1,128)}', space=vmem, size = 0x12000, scoped, tag = 'internal scratch']
  %s0 = inlined_call_operand.vmem [shape: f32[2,10], index: 0, kind: input, shape index: {}]
  %s1 = inlined_call_operand.vmem [shape: f32[408,192], index: 1, kind: input, shape index: {}]
  %s2 = inlined_call_operand.hbm [shape: f32[2,10], index: 2, kind: output, shape index: {}]
  %s3 = sld [smem:[#allocation0]]
  $region18: #{rnn_model2_forward.1} parent=0
    _
  %s5 = ssub.s32 1, %s3
  %s6 = scalar_select 0, %s5, %s3
  $region1: #{rnn_model2_forward.1} parent=0
    #allocation2 [shape = 'u8[1024]{0}', space=vmem, size = 0x400, scoped, tag = 'output window, operand 0, single buffered']
    #allocation3 [shape = 's32[1]{0}', space=sflag, size = 0x4, scoped, tag = 'scoped memory for rnn_model2_forward.1']
    %7 = vsyncpa [#allocation3], 0
    // Predicated region
    $region2: #{rnn_model2_forward.1} parent=1 // pred_check
      _
    $region3: #{rnn_model2_forward.1} parent=1 // pred_check_branch
      %9 = sbr.rel (0) target = $region5
    $region4: #{rnn_model2_forward.1} parent=1 // pred_region
      _
    $region5: #{rnn_model2_forward.1} parent=1 // pred_fallthru
      _
    // Predicated region
    $region6: #{rnn_model2_forward.1} parent=1 // pred_check
      _
    $region7: #{rnn_model2_forward.1} parent=1 // pred_check_branch
      %11 = sbr.rel (0) target = $region9
    $region8: #{rnn_model2_forward.1} parent=1 // pred_region
      _
    $region9: #{rnn_model2_forward.1} parent=1 // pred_fallthru
      _
    %v12 = vld [vmem:[%s0] sm:$0x3]
    %s13 = scalar_lea.vmem %s1, 384
    %v14 = vld [vmem:[%s13] ss:$8 sm:$0x3]
    %16 = vset.pattern.permute.xlu0 0
    %17 = vperm.xlu0 %16, %v12
    %v18 = vpop.permute.xlu0 %17
    %v21 = vlaneseq
    %v22 = vshrl.u32 %v21, 7
    %v23 = vsub.s32 0, %v22
    %v24 = vrot.slane %v14, %v23
    %v25 = vlaneseq
    %v26 = vshrl.u32 %v25, 7
    %v27 = vsub.s32 1, %v26
    %v28 = vrot.slane %v14, %v27
    %v31 = vmul.f32 %v18, %v24
    %v32 = vmul.f32 %v18, %v28
    %s33 = scalar_lea.vmem %s1, 400
    %v34 = vld [vmem:[%s33] ss:$8 sm:$0x3]
    %v36 = vlaneseq
    %v37 = vshrl.u32 %v36, 7
    %v38 = vsub.s32 0, %v37
    %v39 = vrot.slane %v34, %v38
    %v40 = vlaneseq
    %v41 = vshrl.u32 %v40, 7
    %v42 = vsub.s32 1, %v41
    %v43 = vrot.slane %v34, %v42
    %v46 = vadd.f32 %v31, %v39
    %v47 = vadd.f32 %v32, %v43
    %v48 = vld [vmem:[%s1] sm:$0xff]
    %v49 = vld [vmem:[%s1 + $0x8] sm:$0xff]
    %v50 = vld [vmem:[%s1 + $0x10] sm:$0xff]
    %v51 = vld [vmem:[%s1 + $0x18] sm:$0xff]
    %v52 = vld [vmem:[%s1 + $0x20] sm:$0xff]
    %v53 = vld [vmem:[%s1 + $0x28] sm:$0xff]
    %v54 = vld [vmem:[%s1 + $0x30] sm:$0xff]
    %v55 = vld [vmem:[%s1 + $0x38] sm:$0xff]
    %v56 = vld [vmem:[%s1 + $0x40] sm:$0xff]
    %v57 = vld [vmem:[%s1 + $0x48] sm:$0xff]
    %v58 = vld [vmem:[%s1 + $0x50] sm:$0xff]
    %v59 = vld [vmem:[%s1 + $0x58] sm:$0xff]
    %v60 = vld [vmem:[%s1 + $0x60] sm:$0xff]
    %v61 = vld [vmem:[%s1 + $0x68] sm:$0xff]
    %v62 = vld [vmem:[%s1 + $0x70] sm:$0xff]
    %v63 = vld [vmem:[%s1 + $0x78] sm:$0xff]
    %v64 = vld [vmem:[%s1 + $0x80] sm:$0xff]
    %v65 = vld [vmem:[%s1 + $0x88] sm:$0xff]
    %v66 = vld [vmem:[%s1 + $0x90] sm:$0xff]
    %v67 = vld [vmem:[%s1 + $0x98] sm:$0xff]
    %v68 = vld [vmem:[%s1 + $0xa0] sm:$0xff]
    %v69 = vld [vmem:[%s1 + $0xa8] sm:$0xff]
    %v70 = vld [vmem:[%s1 + $0xb0] sm:$0xff]
    %v71 = vld [vmem:[%s1 + $0xb8] sm:$0xff]
    %v72 = vld [vmem:[%s1 + $0xc0] sm:$0xff]
    %v73 = vld [vmem:[%s1 + $0xc8] sm:$0xff]
    %v74 = vld [vmem:[%s1 + $0xd0] sm:$0xff]
    %v75 = vld [vmem:[%s1 + $0xd8] sm:$0xff]
    %v76 = vld [vmem:[%s1 + $0xe0] sm:$0xff]
    %v77 = vld [vmem:[%s1 + $0xe8] sm:$0xff]
    %v78 = vld [vmem:[%s1 + $0xf0] sm:$0xff]
    %v79 = vld [vmem:[%s1 + $0xf8] sm:$0xff]
    %v80 = vld [vmem:[%s1 + $0x100] sm:$0xff]
    %v81 = vld [vmem:[%s1 + $0x108] sm:$0xff]
    %v82 = vld [vmem:[%s1 + $0x110] sm:$0xff]
    %v83 = vld [vmem:[%s1 + $0x118] sm:$0xff]
    %v84 = vld [vmem:[%s1 + $0x120] sm:$0xff]
    %v85 = vld [vmem:[%s1 + $0x128] sm:$0xff]
    %v86 = vld [vmem:[%s1 + $0x130] sm:$0xff]
    %v87 = vld [vmem:[%s1 + $0x138] sm:$0xff]
    %v88 = vld [vmem:[%s1 + $0x140] sm:$0xff]
    %v89 = vld [vmem:[%s1 + $0x148] sm:$0xff]
    %v90 = vld [vmem:[%s1 + $0x150] sm:$0xff]
    %v91 = vld [vmem:[%s1 + $0x158] sm:$0xff]
    %v92 = vld [vmem:[%s1 + $0x160] sm:$0xff]
    %v93 = vld [vmem:[%s1 + $0x168] sm:$0xff]
    %v94 = vld [vmem:[%s1 + $0x170] sm:$0xff]
    %v95 = vld [vmem:[%s1 + $0x178] sm:$0xff]
    %vm96 = vcmask 523264
    %v98 = vsel %vm96, 0.0, 0
    %100 = vmatprep.subr.mxu0 %v79
    %101 = vmatpush1.msra.mxu0 %v78
    %102 = vmatprep.subr.mxu0 %v77
    %103 = vmatpush1.msra.mxu0 %v76
    %104 = vmatprep.subr.mxu0 %v75
    %105 = vmatpush1.msra.mxu0 %v74
    %106 = vmatprep.subr.mxu0 %v73
    %107 = vmatpush1.msra.mxu0 %v72
    %108 = vmatprep.subr.mxu0 %v71
    %109 = vmatpush1.msra.mxu0 %v70
    %110 = vmatprep.subr.mxu0 %v69
    %111 = vmatpush1.msra.mxu0 %v68
    %112 = vmatprep.subr.mxu0 %v67
    %113 = vmatpush1.msra.mxu0 %v66
    %114 = vmatprep.subr.mxu0 %v65
    %115 = vmatpush1.msra.mxu0 %v64
    %116 = vmatprep.subr.mxu0 %v63
    %117 = vmatpush1.msra.mxu0 %v62
    %118 = vmatprep.subr.mxu0 %v61
    %119 = vmatpush1.msra.mxu0 %v60
    %120 = vmatprep.subr.mxu0 %v59
    %121 = vmatpush1.msra.mxu0 %v58
    %122 = vmatprep.subr.mxu0 %v57
    %123 = vmatpush1.msra.mxu0 %v56
    %124 = vmatprep.subr.mxu0 %v55
    %125 = vmatpush1.msra.mxu0 %v54
    %126 = vmatprep.subr.mxu0 %v53
    %127 = vmatpush1.msra.mxu0 %v52
    %128 = vmatprep.subr.mxu0 %v51
    %129 = vmatpush1.msra.mxu0 %v50
    %130 = vmatprep.subr.mxu0 %v49
    %131 = vmatpush1.msra.mxu0 %v48
    %132 = vmatprep.subr.mxu0 0.0
    %133 = vmatpush2.msra.mxu0 0.0
    %134 = vmatprep.subr.mxu0 0.0
    %135 = vmatpush2.msra.mxu0 0.0
    %136 = vmatprep.subr.mxu0 0.0
    %137 = vmatpush2.msra.mxu0 0.0
    %138 = vmatprep.subr.mxu0 0.0
    %139 = vmatpush2.msra.mxu0 0.0
    %140 = vmatprep.subr.mxu0 0.0
    %141 = vmatpush2.msra.mxu0 0.0
    %142 = vmatprep.subr.mxu0 0.0
    %143 = vmatpush2.msra.mxu0 0.0
    %144 = vmatprep.subr.mxu0 0.0
    %145 = vmatpush2.msra.mxu0 0.0
    %146 = vmatprep.subr.mxu0 0.0
    %147 = vmatpush2.msra.mxu0 0.0
    %148 = vmatprep.subr.mxu0 %v95
    %149 = vmatpush2.msra.mxu0 %v94
    %150 = vmatprep.subr.mxu0 %v93
    %151 = vmatpush2.msra.mxu0 %v92
    %152 = vmatprep.subr.mxu0 %v91
    %153 = vmatpush2.msra.mxu0 %v90
    %154 = vmatprep.subr.mxu0 %v89
    %155 = vmatpush2.msra.mxu0 %v88
    %156 = vmatprep.subr.mxu0 %v87
    %157 = vmatpush2.msra.mxu0 %v86
    %158 = vmatprep.subr.mxu0 %v85
    %159 = vmatpush2.msra.mxu0 %v84
    %160 = vmatprep.subr.mxu0 %v83
    %161 = vmatpush2.msra.mxu0 %v82
    %162 = vmatprep.subr.mxu0 %v81
    %163 = vmatpush2.msra.mxu0 %v80
    %164 = vmatprep.mubr.f32.mxu0 %v98
    %165 = vmatmul.mubr.f32.gmra.mxu0 0.0
    %v166 = vpop.f32.mrf.mxu0
    %v167 = vadd.f32 %v46, %v166
    %v168 = vpop.f32.mrf.mxu0
    %v169 = vadd.f32 %v47, %v168
    %170 = vdwg.mxu0
    %v171 = vtanh.pop %v167
    %v172 = vtanh.pop %v169
    %173 = vset.pattern.permute.xlu0 1
    %174 = vperm.xlu0 %173, %v12
    %v175 = vpop.permute.xlu0 %174
    %v177 = vmul.f32 %v175, %v24
    %v178 = vmul.f32 %v175, %v28
    %s179 = scalar_lea.vmem %s1, 401
    %v180 = vld [vmem:[%s179] ss:$8 sm:$0x3]
    %v182 = vlaneseq
    %v183 = vshrl.u32 %v182, 7
    %v184 = vsub.s32 0, %v183
    %v185 = vrot.slane %v180, %v184
    %v186 = vlaneseq
    %v187 = vshrl.u32 %v186, 7
    %v188 = vsub.s32 1, %v187
    %v189 = vrot.slane %v180, %v188
    %v192 = vadd.f32 %v177, %v185
    %v193 = vadd.f32 %v178, %v189
    %v195 = vsel %vm96, %v172, 0
    %197 = vmatprep.subr.mxu0 %v79
    %198 = vmatpush1.msra.mxu0 %v78
    %199 = vmatprep.subr.mxu0 %v77
    %200 = vmatpush1.msra.mxu0 %v76
    %201 = vmatprep.subr.mxu0 %v75
    %202 = vmatpush1.msra.mxu0 %v74
    %203 = vmatprep.subr.mxu0 %v73
    %204 = vmatpush1.msra.mxu0 %v72
    %205 = vmatprep.subr.mxu0 %v71
    %206 = vmatpush1.msra.mxu0 %v70
    %207 = vmatprep.subr.mxu0 %v69
    %208 = vmatpush1.msra.mxu0 %v68
    %209 = vmatprep.subr.mxu0 %v67
    %210 = vmatpush1.msra.mxu0 %v66
    %211 = vmatprep.subr.mxu0 %v65
    %212 = vmatpush1.msra.mxu0 %v64
    %213 = vmatprep.subr.mxu0 %v63
    %214 = vmatpush1.msra.mxu0 %v62
    %215 = vmatprep.subr.mxu0 %v61
    %216 = vmatpush1.msra.mxu0 %v60
    %217 = vmatprep.subr.mxu0 %v59
    %218 = vmatpush1.msra.mxu0 %v58
    %219 = vmatprep.subr.mxu0 %v57
    %220 = vmatpush1.msra.mxu0 %v56
    %221 = vmatprep.subr.mxu0 %v55
    %222 = vmatpush1.msra.mxu0 %v54
    %223 = vmatprep.subr.mxu0 %v53
    %224 = vmatpush1.msra.mxu0 %v52
    %225 = vmatprep.subr.mxu0 %v51
    %226 = vmatpush1.msra.mxu0 %v50
    %227 = vmatprep.subr.mxu0 %v49
    %228 = vmatpush1.msra.mxu0 %v48
    %229 = vmatprep.subr.mxu0 0.0
    %230 = vmatpush2.msra.mxu0 0.0
    %231 = vmatprep.subr.mxu0 0.0
    %232 = vmatpush2.msra.mxu0 0.0
    %233 = vmatprep.subr.mxu0 0.0
    %234 = vmatpush2.msra.mxu0 0.0
    %235 = vmatprep.subr.mxu0 0.0
    %236 = vmatpush2.msra.mxu0 0.0
    %237 = vmatprep.subr.mxu0 0.0
    %238 = vmatpush2.msra.mxu0 0.0
    %239 = vmatprep.subr.mxu0 0.0
    %240 = vmatpush2.msra.mxu0 0.0
    %241 = vmatprep.subr.mxu0 0.0
    %242 = vmatpush2.msra.mxu0 0.0
    %243 = vmatprep.subr.mxu0 0.0
    %244 = vmatpush2.msra.mxu0 0.0
    %245 = vmatprep.subr.mxu0 %v95
    %246 = vmatpush2.msra.mxu0 %v94
    %247 = vmatprep.subr.mxu0 %v93
    %248 = vmatpush2.msra.mxu0 %v92
    %249 = vmatprep.subr.mxu0 %v91
    %250 = vmatpush2.msra.mxu0 %v90
    %251 = vmatprep.subr.mxu0 %v89
    %252 = vmatpush2.msra.mxu0 %v88
    %253 = vmatprep.subr.mxu0 %v87
    %254 = vmatpush2.msra.mxu0 %v86
    %255 = vmatprep.subr.mxu0 %v85
    %256 = vmatpush2.msra.mxu0 %v84
    %257 = vmatprep.subr.mxu0 %v83
    %258 = vmatpush2.msra.mxu0 %v82
    %259 = vmatprep.subr.mxu0 %v81
    %260 = vmatpush2.msra.mxu0 %v80
    %261 = vmatprep.mubr.f32.mxu0 %v195
    %262 = vmatmul.mubr.f32.gmra.mxu0 %v171
    %v263 = vpop.f32.mrf.mxu0
    %v264 = vadd.f32 %v192, %v263
    %v265 = vpop.f32.mrf.mxu0
    %v266 = vadd.f32 %v193, %v265
    %267 = vdwg.mxu0
    %v268 = vtanh.pop %v264
    %v269 = vtanh.pop %v266
    %270 = vset.pattern.permute.xlu0 2
    %271 = vperm.xlu0 %270, %v12
    %v272 = vpop.permute.xlu0 %271
    %v274 = vmul.f32 %v272, %v24
    %v275 = vmul.f32 %v272, %v28
    %s276 = scalar_lea.vmem %s1, 402
    %v277 = vld [vmem:[%s276] ss:$8 sm:$0x3]
    %v279 = vlaneseq
    %v280 = vshrl.u32 %v279, 7
    %v281 = vsub.s32 0, %v280
    %v282 = vrot.slane %v277, %v281
    %v283 = vlaneseq
    %v284 = vshrl.u32 %v283, 7
    %v285 = vsub.s32 1, %v284
    %v286 = vrot.slane %v277, %v285
    %v289 = vadd.f32 %v274, %v282
    %v290 = vadd.f32 %v275, %v286
    %v292 = vsel %vm96, %v269, 0
    %294 = vmatprep.subr.mxu0 %v79
    %295 = vmatpush1.msra.mxu0 %v78
    %296 = vmatprep.subr.mxu0 %v77
    %297 = vmatpush1.msra.mxu0 %v76
    %298 = vmatprep.subr.mxu0 %v75
    %299 = vmatpush1.msra.mxu0 %v74
    %300 = vmatprep.subr.mxu0 %v73
    %301 = vmatpush1.msra.mxu0 %v72
    %302 = vmatprep.subr.mxu0 %v71
    %303 = vmatpush1.msra.mxu0 %v70
    %304 = vmatprep.subr.mxu0 %v69
    %305 = vmatpush1.msra.mxu0 %v68
    %306 = vmatprep.subr.mxu0 %v67
    %307 = vmatpush1.msra.mxu0 %v66
    %308 = vmatprep.subr.mxu0 %v65
    %309 = vmatpush1.msra.mxu0 %v64
    %310 = vmatprep.subr.mxu0 %v63
    %311 = vmatpush1.msra.mxu0 %v62
    %312 = vmatprep.subr.mxu0 %v61
    %313 = vmatpush1.msra.mxu0 %v60
    %314 = vmatprep.subr.mxu0 %v59
    %315 = vmatpush1.msra.mxu0 %v58
    %316 = vmatprep.subr.mxu0 %v57
    %317 = vmatpush1.msra.mxu0 %v56
    %318 = vmatprep.subr.mxu0 %v55
    %319 = vmatpush1.msra.mxu0 %v54
    %320 = vmatprep.subr.mxu0 %v53
    %321 = vmatpush1.msra.mxu0 %v52
    %322 = vmatprep.subr.mxu0 %v51
    %323 = vmatpush1.msra.mxu0 %v50
    %324 = vmatprep.subr.mxu0 %v49
    %325 = vmatpush1.msra.mxu0 %v48
    %326 = vmatprep.subr.mxu0 0.0
    %327 = vmatpush2.msra.mxu0 0.0
    %328 = vmatprep.subr.mxu0 0.0
    %329 = vmatpush2.msra.mxu0 0.0
    %330 = vmatprep.subr.mxu0 0.0
    %331 = vmatpush2.msra.mxu0 0.0
    %332 = vmatprep.subr.mxu0 0.0
    %333 = vmatpush2.msra.mxu0 0.0
    %334 = vmatprep.subr.mxu0 0.0
    %335 = vmatpush2.msra.mxu0 0.0
    %336 = vmatprep.subr.mxu0 0.0
    %337 = vmatpush2.msra.mxu0 0.0
    %338 = vmatprep.subr.mxu0 0.0
    %339 = vmatpush2.msra.mxu0 0.0
    %340 = vmatprep.subr.mxu0 0.0
    %341 = vmatpush2.msra.mxu0 0.0
    %342 = vmatprep.subr.mxu0 %v95
    %343 = vmatpush2.msra.mxu0 %v94
    %344 = vmatprep.subr.mxu0 %v93
    %345 = vmatpush2.msra.mxu0 %v92
    %346 = vmatprep.subr.mxu0 %v91
    %347 = vmatpush2.msra.mxu0 %v90
    %348 = vmatprep.subr.mxu0 %v89
    %349 = vmatpush2.msra.mxu0 %v88
    %350 = vmatprep.subr.mxu0 %v87
    %351 = vmatpush2.msra.mxu0 %v86
    %352 = vmatprep.subr.mxu0 %v85
    %353 = vmatpush2.msra.mxu0 %v84
    %354 = vmatprep.subr.mxu0 %v83
    %355 = vmatpush2.msra.mxu0 %v82
    %356 = vmatprep.subr.mxu0 %v81
    %357 = vmatpush2.msra.mxu0 %v80
    %358 = vmatprep.mubr.f32.mxu0 %v292
    %359 = vmatmul.mubr.f32.gmra.mxu0 %v268
    %v360 = vpop.f32.mrf.mxu0
    %v361 = vadd.f32 %v289, %v360
    %v362 = vpop.f32.mrf.mxu0
    %v363 = vadd.f32 %v290, %v362
    %364 = vdwg.mxu0
    %v365 = vtanh.pop %v361
    %v366 = vtanh.pop %v363
    %367 = vset.pattern.permute.xlu0 3
    %368 = vperm.xlu0 %367, %v12
    %v369 = vpop.permute.xlu0 %368
    %v371 = vmul.f32 %v369, %v24
    %v372 = vmul.f32 %v369, %v28
    %v373 = vadd.f32 %v371, %v282
    %v374 = vadd.f32 %v372, %v286
    %v376 = vsel %vm96, %v366, 0
    %378 = vmatprep.subr.mxu0 %v79
    %379 = vmatpush1.msra.mxu0 %v78
    %380 = vmatprep.subr.mxu0 %v77
    %381 = vmatpush1.msra.mxu0 %v76
    %382 = vmatprep.subr.mxu0 %v75
    %383 = vmatpush1.msra.mxu0 %v74
    %384 = vmatprep.subr.mxu0 %v73
    %385 = vmatpush1.msra.mxu0 %v72
    %386 = vmatprep.subr.mxu0 %v71
    %387 = vmatpush1.msra.mxu0 %v70
    %388 = vmatprep.subr.mxu0 %v69
    %389 = vmatpush1.msra.mxu0 %v68
    %390 = vmatprep.subr.mxu0 %v67
    %391 = vmatpush1.msra.mxu0 %v66
    %392 = vmatprep.subr.mxu0 %v65
    %393 = vmatpush1.msra.mxu0 %v64
    %394 = vmatprep.subr.mxu0 %v63
    %395 = vmatpush1.msra.mxu0 %v62
    %396 = vmatprep.subr.mxu0 %v61
    %397 = vmatpush1.msra.mxu0 %v60
    %398 = vmatprep.subr.mxu0 %v59
    %399 = vmatpush1.msra.mxu0 %v58
    %400 = vmatprep.subr.mxu0 %v57
    %401 = vmatpush1.msra.mxu0 %v56
    %402 = vmatprep.subr.mxu0 %v55
    %403 = vmatpush1.msra.mxu0 %v54
    %404 = vmatprep.subr.mxu0 %v53
    %405 = vmatpush1.msra.mxu0 %v52
    %406 = vmatprep.subr.mxu0 %v51
    %407 = vmatpush1.msra.mxu0 %v50
    %408 = vmatprep.subr.mxu0 %v49
    %409 = vmatpush1.msra.mxu0 %v48
    %410 = vmatprep.subr.mxu0 0.0
    %411 = vmatpush2.msra.mxu0 0.0
    %412 = vmatprep.subr.mxu0 0.0
    %413 = vmatpush2.msra.mxu0 0.0
    %414 = vmatprep.subr.mxu0 0.0
    %415 = vmatpush2.msra.mxu0 0.0
    %416 = vmatprep.subr.mxu0 0.0
    %417 = vmatpush2.msra.mxu0 0.0
    %418 = vmatprep.subr.mxu0 0.0
    %419 = vmatpush2.msra.mxu0 0.0
    %420 = vmatprep.subr.mxu0 0.0
    %421 = vmatpush2.msra.mxu0 0.0
    %422 = vmatprep.subr.mxu0 0.0
    %423 = vmatpush2.msra.mxu0 0.0
    %424 = vmatprep.subr.mxu0 0.0
    %425 = vmatpush2.msra.mxu0 0.0
    %426 = vmatprep.subr.mxu0 %v95
    %427 = vmatpush2.msra.mxu0 %v94
    %428 = vmatprep.subr.mxu0 %v93
    %429 = vmatpush2.msra.mxu0 %v92
    %430 = vmatprep.subr.mxu0 %v91
    %431 = vmatpush2.msra.mxu0 %v90
    %432 = vmatprep.subr.mxu0 %v89
    %433 = vmatpush2.msra.mxu0 %v88
    %434 = vmatprep.subr.mxu0 %v87
    %435 = vmatpush2.msra.mxu0 %v86
    %436 = vmatprep.subr.mxu0 %v85
    %437 = vmatpush2.msra.mxu0 %v84
    %438 = vmatprep.subr.mxu0 %v83
    %439 = vmatpush2.msra.mxu0 %v82
    %440 = vmatprep.subr.mxu0 %v81
    %441 = vmatpush2.msra.mxu0 %v80
    %442 = vmatprep.mubr.f32.mxu0 %v376
    %443 = vmatmul.mubr.f32.gmra.mxu0 %v365
    %v444 = vpop.f32.mrf.mxu0
    %v445 = vadd.f32 %v373, %v444
    %v446 = vpop.f32.mrf.mxu0
    %v447 = vadd.f32 %v374, %v446
    %448 = vdwg.mxu0
    %v449 = vtanh.pop %v445
    %v450 = vtanh.pop %v447
    %451 = vset.pattern.permute.xlu0 4
    %452 = vperm.xlu0 %451, %v12
    %v453 = vpop.permute.xlu0 %452
    %v455 = vmul.f32 %v453, %v24
    %v456 = vmul.f32 %v453, %v28
    %v457 = vadd.f32 %v455, %v282
    %v458 = vadd.f32 %v456, %v286
    %v460 = vsel %vm96, %v450, 0
    %462 = vmatprep.subr.mxu0 %v79
    %463 = vmatpush1.msra.mxu0 %v78
    %464 = vmatprep.subr.mxu0 %v77
    %465 = vmatpush1.msra.mxu0 %v76
    %466 = vmatprep.subr.mxu0 %v75
    %467 = vmatpush1.msra.mxu0 %v74
    %468 = vmatprep.subr.mxu0 %v73
    %469 = vmatpush1.msra.mxu0 %v72
    %470 = vmatprep.subr.mxu0 %v71
    %471 = vmatpush1.msra.mxu0 %v70
    %472 = vmatprep.subr.mxu0 %v69
    %473 = vmatpush1.msra.mxu0 %v68
    %474 = vmatprep.subr.mxu0 %v67
    %475 = vmatpush1.msra.mxu0 %v66
    %476 = vmatprep.subr.mxu0 %v65
    %477 = vmatpush1.msra.mxu0 %v64
    %478 = vmatprep.subr.mxu0 %v63
    %479 = vmatpush1.msra.mxu0 %v62
    %480 = vmatprep.subr.mxu0 %v61
    %481 = vmatpush1.msra.mxu0 %v60
    %482 = vmatprep.subr.mxu0 %v59
    %483 = vmatpush1.msra.mxu0 %v58
    %484 = vmatprep.subr.mxu0 %v57
    %485 = vmatpush1.msra.mxu0 %v56
    %486 = vmatprep.subr.mxu0 %v55
    %487 = vmatpush1.msra.mxu0 %v54
    %488 = vmatprep.subr.mxu0 %v53
    %489 = vmatpush1.msra.mxu0 %v52
    %490 = vmatprep.subr.mxu0 %v51
    %491 = vmatpush1.msra.mxu0 %v50
    %492 = vmatprep.subr.mxu0 %v49
    %493 = vmatpush1.msra.mxu0 %v48
    %494 = vmatprep.subr.mxu0 0.0
    %495 = vmatpush2.msra.mxu0 0.0
    %496 = vmatprep.subr.mxu0 0.0
    %497 = vmatpush2.msra.mxu0 0.0
    %498 = vmatprep.subr.mxu0 0.0
    %499 = vmatpush2.msra.mxu0 0.0
    %500 = vmatprep.subr.mxu0 0.0
    %501 = vmatpush2.msra.mxu0 0.0
    %502 = vmatprep.subr.mxu0 0.0
    %503 = vmatpush2.msra.mxu0 0.0
    %504 = vmatprep.subr.mxu0 0.0
    %505 = vmatpush2.msra.mxu0 0.0
    %506 = vmatprep.subr.mxu0 0.0
    %507 = vmatpush2.msra.mxu0 0.0
    %508 = vmatprep.subr.mxu0 0.0
    %509 = vmatpush2.msra.mxu0 0.0
    %510 = vmatprep.subr.mxu0 %v95
    %511 = vmatpush2.msra.mxu0 %v94
    %512 = vmatprep.subr.mxu0 %v93
    %513 = vmatpush2.msra.mxu0 %v92
    %514 = vmatprep.subr.mxu0 %v91
    %515 = vmatpush2.msra.mxu0 %v90
    %516 = vmatprep.subr.mxu0 %v89
    %517 = vmatpush2.msra.mxu0 %v88
    %518 = vmatprep.subr.mxu0 %v87
    %519 = vmatpush2.msra.mxu0 %v86
    %520 = vmatprep.subr.mxu0 %v85
    %521 = vmatpush2.msra.mxu0 %v84
    %522 = vmatprep.subr.mxu0 %v83
    %523 = vmatpush2.msra.mxu0 %v82
    %524 = vmatprep.subr.mxu0 %v81
    %525 = vmatpush2.msra.mxu0 %v80
    %526 = vmatprep.mubr.f32.mxu0 %v460
    %527 = vmatmul.mubr.f32.gmra.mxu0 %v449
    %v528 = vpop.f32.mrf.mxu0
    %v529 = vadd.f32 %v457, %v528
    %v530 = vpop.f32.mrf.mxu0
    %v531 = vadd.f32 %v458, %v530
    %532 = vdwg.mxu0
    %v533 = vtanh.pop %v529
    %v534 = vtanh.pop %v531
    %535 = vset.pattern.permute.xlu0 5
    %536 = vperm.xlu0 %535, %v12
    %v537 = vpop.permute.xlu0 %536
    %v539 = vmul.f32 %v537, %v24
    %v540 = vmul.f32 %v537, %v28
    %v541 = vadd.f32 %v539, %v282
    %v542 = vadd.f32 %v540, %v286
    %v544 = vsel %vm96, %v534, 0
    %546 = vmatprep.subr.mxu0 %v79
    %547 = vmatpush1.msra.mxu0 %v78
    %548 = vmatprep.subr.mxu0 %v77
    %549 = vmatpush1.msra.mxu0 %v76
    %550 = vmatprep.subr.mxu0 %v75
    %551 = vmatpush1.msra.mxu0 %v74
    %552 = vmatprep.subr.mxu0 %v73
    %553 = vmatpush1.msra.mxu0 %v72
    %554 = vmatprep.subr.mxu0 %v71
    %555 = vmatpush1.msra.mxu0 %v70
    %556 = vmatprep.subr.mxu0 %v69
    %557 = vmatpush1.msra.mxu0 %v68
    %558 = vmatprep.subr.mxu0 %v67
    %559 = vmatpush1.msra.mxu0 %v66
    %560 = vmatprep.subr.mxu0 %v65
    %561 = vmatpush1.msra.mxu0 %v64
    %562 = vmatprep.subr.mxu0 %v63
    %563 = vmatpush1.msra.mxu0 %v62
    %564 = vmatprep.subr.mxu0 %v61
    %565 = vmatpush1.msra.mxu0 %v60
    %566 = vmatprep.subr.mxu0 %v59
    %567 = vmatpush1.msra.mxu0 %v58
    %568 = vmatprep.subr.mxu0 %v57
    %569 = vmatpush1.msra.mxu0 %v56
    %570 = vmatprep.subr.mxu0 %v55
    %571 = vmatpush1.msra.mxu0 %v54
    %572 = vmatprep.subr.mxu0 %v53
    %573 = vmatpush1.msra.mxu0 %v52
    %574 = vmatprep.subr.mxu0 %v51
    %575 = vmatpush1.msra.mxu0 %v50
    %576 = vmatprep.subr.mxu0 %v49
    %577 = vmatpush1.msra.mxu0 %v48
    %578 = vmatprep.subr.mxu0 0.0
    %579 = vmatpush2.msra.mxu0 0.0
    %580 = vmatprep.subr.mxu0 0.0
    %581 = vmatpush2.msra.mxu0 0.0
    %582 = vmatprep.subr.mxu0 0.0
    %583 = vmatpush2.msra.mxu0 0.0
    %584 = vmatprep.subr.mxu0 0.0
    %585 = vmatpush2.msra.mxu0 0.0
    %586 = vmatprep.subr.mxu0 0.0
    %587 = vmatpush2.msra.mxu0 0.0
    %588 = vmatprep.subr.mxu0 0.0
    %589 = vmatpush2.msra.mxu0 0.0
    %590 = vmatprep.subr.mxu0 0.0
    %591 = vmatpush2.msra.mxu0 0.0
    %592 = vmatprep.subr.mxu0 0.0
    %593 = vmatpush2.msra.mxu0 0.0
    %594 = vmatprep.subr.mxu0 %v95
    %595 = vmatpush2.msra.mxu0 %v94
    %596 = vmatprep.subr.mxu0 %v93
    %597 = vmatpush2.msra.mxu0 %v92
    %598 = vmatprep.subr.mxu0 %v91
    %599 = vmatpush2.msra.mxu0 %v90
    %600 = vmatprep.subr.mxu0 %v89
    %601 = vmatpush2.msra.mxu0 %v88
    %602 = vmatprep.subr.mxu0 %v87
    %603 = vmatpush2.msra.mxu0 %v86
    %604 = vmatprep.subr.mxu0 %v85
    %605 = vmatpush2.msra.mxu0 %v84
    %606 = vmatprep.subr.mxu0 %v83
    %607 = vmatpush2.msra.mxu0 %v82
    %608 = vmatprep.subr.mxu0 %v81
    %609 = vmatpush2.msra.mxu0 %v80
    %610 = vmatprep.mubr.f32.mxu0 %v544
    %611 = vmatmul.mubr.f32.gmra.mxu0 %v533
    %v612 = vpop.f32.mrf.mxu0
    %v613 = vadd.f32 %v541, %v612
    %v614 = vpop.f32.mrf.mxu0
    %v615 = vadd.f32 %v542, %v614
    %616 = vdwg.mxu0
    %v617 = vtanh.pop %v613
    %v618 = vtanh.pop %v615
    %619 = vset.pattern.permute.xlu0 6
    %620 = vperm.xlu0 %619, %v12
    %v621 = vpop.permute.xlu0 %620
    %v623 = vmul.f32 %v621, %v24
    %v624 = vmul.f32 %v621, %v28
    %v625 = vadd.f32 %v623, %v282
    %v626 = vadd.f32 %v624, %v286
    %v628 = vsel %vm96, %v618, 0
    %630 = vmatprep.subr.mxu0 %v79
    %631 = vmatpush1.msra.mxu0 %v78
    %632 = vmatprep.subr.mxu0 %v77
    %633 = vmatpush1.msra.mxu0 %v76
    %634 = vmatprep.subr.mxu0 %v75
    %635 = vmatpush1.msra.mxu0 %v74
    %636 = vmatprep.subr.mxu0 %v73
    %637 = vmatpush1.msra.mxu0 %v72
    %638 = vmatprep.subr.mxu0 %v71
    %639 = vmatpush1.msra.mxu0 %v70
    %640 = vmatprep.subr.mxu0 %v69
    %641 = vmatpush1.msra.mxu0 %v68
    %642 = vmatprep.subr.mxu0 %v67
    %643 = vmatpush1.msra.mxu0 %v66
    %644 = vmatprep.subr.mxu0 %v65
    %645 = vmatpush1.msra.mxu0 %v64
    %646 = vmatprep.subr.mxu0 %v63
    %647 = vmatpush1.msra.mxu0 %v62
    %648 = vmatprep.subr.mxu0 %v61
    %649 = vmatpush1.msra.mxu0 %v60
    %650 = vmatprep.subr.mxu0 %v59
    %651 = vmatpush1.msra.mxu0 %v58
    %652 = vmatprep.subr.mxu0 %v57
    %653 = vmatpush1.msra.mxu0 %v56
    %654 = vmatprep.subr.mxu0 %v55
    %655 = vmatpush1.msra.mxu0 %v54
    %656 = vmatprep.subr.mxu0 %v53
    %657 = vmatpush1.msra.mxu0 %v52
    %658 = vmatprep.subr.mxu0 %v51
    %659 = vmatpush1.msra.mxu0 %v50
    %660 = vmatprep.subr.mxu0 %v49
    %661 = vmatpush1.msra.mxu0 %v48
    %662 = vmatprep.subr.mxu0 0.0
    %663 = vmatpush2.msra.mxu0 0.0
    %664 = vmatprep.subr.mxu0 0.0
    %665 = vmatpush2.msra.mxu0 0.0
    %666 = vmatprep.subr.mxu0 0.0
    %667 = vmatpush2.msra.mxu0 0.0
    %668 = vmatprep.subr.mxu0 0.0
    %669 = vmatpush2.msra.mxu0 0.0
    %670 = vmatprep.subr.mxu0 0.0
    %671 = vmatpush2.msra.mxu0 0.0
    %672 = vmatprep.subr.mxu0 0.0
    %673 = vmatpush2.msra.mxu0 0.0
    %674 = vmatprep.subr.mxu0 0.0
    %675 = vmatpush2.msra.mxu0 0.0
    %676 = vmatprep.subr.mxu0 0.0
    %677 = vmatpush2.msra.mxu0 0.0
    %678 = vmatprep.subr.mxu0 %v95
    %679 = vmatpush2.msra.mxu0 %v94
    %680 = vmatprep.subr.mxu0 %v93
    %681 = vmatpush2.msra.mxu0 %v92
    %682 = vmatprep.subr.mxu0 %v91
    %683 = vmatpush2.msra.mxu0 %v90
    %684 = vmatprep.subr.mxu0 %v89
    %685 = vmatpush2.msra.mxu0 %v88
    %686 = vmatprep.subr.mxu0 %v87
    %687 = vmatpush2.msra.mxu0 %v86
    %688 = vmatprep.subr.mxu0 %v85
    %689 = vmatpush2.msra.mxu0 %v84
    %690 = vmatprep.subr.mxu0 %v83
    %691 = vmatpush2.msra.mxu0 %v82
    %692 = vmatprep.subr.mxu0 %v81
    %693 = vmatpush2.msra.mxu0 %v80
    %694 = vmatprep.mubr.f32.mxu0 %v628
    %695 = vmatmul.mubr.f32.gmra.mxu0 %v617
    %v696 = vpop.f32.mrf.mxu0
    %v697 = vadd.f32 %v625, %v696
    %v698 = vpop.f32.mrf.mxu0
    %v699 = vadd.f32 %v626, %v698
    %700 = vdwg.mxu0
    %v701 = vtanh.pop %v697
    %v702 = vtanh.pop %v699
    %703 = vset.pattern.permute.xlu0 7
    %704 = vperm.xlu0 %703, %v12
    %v705 = vpop.permute.xlu0 %704
    %v707 = vmul.f32 %v705, %v24
    %v708 = vmul.f32 %v705, %v28
    %v709 = vadd.f32 %v707, %v282
    %v710 = vadd.f32 %v708, %v286
    %v712 = vsel %vm96, %v702, 0
    %714 = vmatprep.subr.mxu0 %v79
    %715 = vmatpush1.msra.mxu0 %v78
    %716 = vmatprep.subr.mxu0 %v77
    %717 = vmatpush1.msra.mxu0 %v76
    %718 = vmatprep.subr.mxu0 %v75
    %719 = vmatpush1.msra.mxu0 %v74
    %720 = vmatprep.subr.mxu0 %v73
    %721 = vmatpush1.msra.mxu0 %v72
    %722 = vmatprep.subr.mxu0 %v71
    %723 = vmatpush1.msra.mxu0 %v70
    %724 = vmatprep.subr.mxu0 %v69
    %725 = vmatpush1.msra.mxu0 %v68
    %726 = vmatprep.subr.mxu0 %v67
    %727 = vmatpush1.msra.mxu0 %v66
    %728 = vmatprep.subr.mxu0 %v65
    %729 = vmatpush1.msra.mxu0 %v64
    %730 = vmatprep.subr.mxu0 %v63
    %731 = vmatpush1.msra.mxu0 %v62
    %732 = vmatprep.subr.mxu0 %v61
    %733 = vmatpush1.msra.mxu0 %v60
    %734 = vmatprep.subr.mxu0 %v59
    %735 = vmatpush1.msra.mxu0 %v58
    %736 = vmatprep.subr.mxu0 %v57
    %737 = vmatpush1.msra.mxu0 %v56
    %738 = vmatprep.subr.mxu0 %v55
    %739 = vmatpush1.msra.mxu0 %v54
    %740 = vmatprep.subr.mxu0 %v53
    %741 = vmatpush1.msra.mxu0 %v52
    %742 = vmatprep.subr.mxu0 %v51
    %743 = vmatpush1.msra.mxu0 %v50
    %744 = vmatprep.subr.mxu0 %v49
    %745 = vmatpush1.msra.mxu0 %v48
    %746 = vmatprep.subr.mxu0 0.0
    %747 = vmatpush2.msra.mxu0 0.0
    %748 = vmatprep.subr.mxu0 0.0
    %749 = vmatpush2.msra.mxu0 0.0
    %750 = vmatprep.subr.mxu0 0.0
    %751 = vmatpush2.msra.mxu0 0.0
    %752 = vmatprep.subr.mxu0 0.0
    %753 = vmatpush2.msra.mxu0 0.0
    %754 = vmatprep.subr.mxu0 0.0
    %755 = vmatpush2.msra.mxu0 0.0
    %756 = vmatprep.subr.mxu0 0.0
    %757 = vmatpush2.msra.mxu0 0.0
    %758 = vmatprep.subr.mxu0 0.0
    %759 = vmatpush2.msra.mxu0 0.0
    %760 = vmatprep.subr.mxu0 0.0
    %761 = vmatpush2.msra.mxu0 0.0
    %762 = vmatprep.subr.mxu0 %v95
    %763 = vmatpush2.msra.mxu0 %v94
    %764 = vmatprep.subr.mxu0 %v93
    %765 = vmatpush2.msra.mxu0 %v92
    %766 = vmatprep.subr.mxu0 %v91
    %767 = vmatpush2.msra.mxu0 %v90
    %768 = vmatprep.subr.mxu0 %v89
    %769 = vmatpush2.msra.mxu0 %v88
    %770 = vmatprep.subr.mxu0 %v87
    %771 = vmatpush2.msra.mxu0 %v86
    %772 = vmatprep.subr.mxu0 %v85
    %773 = vmatpush2.msra.mxu0 %v84
    %774 = vmatprep.subr.mxu0 %v83
    %775 = vmatpush2.msra.mxu0 %v82
    %776 = vmatprep.subr.mxu0 %v81
    %777 = vmatpush2.msra.mxu0 %v80
    %778 = vmatprep.mubr.f32.mxu0 %v712
    %779 = vmatmul.mubr.f32.gmra.mxu0 %v701
    %v780 = vpop.f32.mrf.mxu0
    %v781 = vadd.f32 %v709, %v780
    %v782 = vpop.f32.mrf.mxu0
    %v783 = vadd.f32 %v710, %v782
    %784 = vdwg.mxu0
    %v785 = vtanh.pop %v781
    %v786 = vtanh.pop %v783
    %787 = vset.pattern.permute.xlu0 8
    %788 = vperm.xlu0 %787, %v12
    %v789 = vpop.permute.xlu0 %788
    %v791 = vmul.f32 %v789, %v24
    %v792 = vmul.f32 %v789, %v28
    %v793 = vadd.f32 %v791, %v282
    %v794 = vadd.f32 %v792, %v286
    %v796 = vsel %vm96, %v786, 0
    %798 = vmatprep.subr.mxu0 %v79
    %799 = vmatpush1.msra.mxu0 %v78
    %800 = vmatprep.subr.mxu0 %v77
    %801 = vmatpush1.msra.mxu0 %v76
    %802 = vmatprep.subr.mxu0 %v75
    %803 = vmatpush1.msra.mxu0 %v74
    %804 = vmatprep.subr.mxu0 %v73
    %805 = vmatpush1.msra.mxu0 %v72
    %806 = vmatprep.subr.mxu0 %v71
    %807 = vmatpush1.msra.mxu0 %v70
    %808 = vmatprep.subr.mxu0 %v69
    %809 = vmatpush1.msra.mxu0 %v68
    %810 = vmatprep.subr.mxu0 %v67
    %811 = vmatpush1.msra.mxu0 %v66
    %812 = vmatprep.subr.mxu0 %v65
    %813 = vmatpush1.msra.mxu0 %v64
    %814 = vmatprep.subr.mxu0 %v63
    %815 = vmatpush1.msra.mxu0 %v62
    %816 = vmatprep.subr.mxu0 %v61
    %817 = vmatpush1.msra.mxu0 %v60
    %818 = vmatprep.subr.mxu0 %v59
    %819 = vmatpush1.msra.mxu0 %v58
    %820 = vmatprep.subr.mxu0 %v57
    %821 = vmatpush1.msra.mxu0 %v56
    %822 = vmatprep.subr.mxu0 %v55
    %823 = vmatpush1.msra.mxu0 %v54
    %824 = vmatprep.subr.mxu0 %v53
    %825 = vmatpush1.msra.mxu0 %v52
    %826 = vmatprep.subr.mxu0 %v51
    %827 = vmatpush1.msra.mxu0 %v50
    %828 = vmatprep.subr.mxu0 %v49
    %829 = vmatpush1.msra.mxu0 %v48
    %830 = vmatprep.subr.mxu0 0.0
    %831 = vmatpush2.msra.mxu0 0.0
    %832 = vmatprep.subr.mxu0 0.0
    %833 = vmatpush2.msra.mxu0 0.0
    %834 = vmatprep.subr.mxu0 0.0
    %835 = vmatpush2.msra.mxu0 0.0
    %836 = vmatprep.subr.mxu0 0.0
    %837 = vmatpush2.msra.mxu0 0.0
    %838 = vmatprep.subr.mxu0 0.0
    %839 = vmatpush2.msra.mxu0 0.0
    %840 = vmatprep.subr.mxu0 0.0
    %841 = vmatpush2.msra.mxu0 0.0
    %842 = vmatprep.subr.mxu0 0.0
    %843 = vmatpush2.msra.mxu0 0.0
    %844 = vmatprep.subr.mxu0 0.0
    %845 = vmatpush2.msra.mxu0 0.0
    %846 = vmatprep.subr.mxu0 %v95
    %847 = vmatpush2.msra.mxu0 %v94
    %848 = vmatprep.subr.mxu0 %v93
    %849 = vmatpush2.msra.mxu0 %v92
    %850 = vmatprep.subr.mxu0 %v91
    %851 = vmatpush2.msra.mxu0 %v90
    %852 = vmatprep.subr.mxu0 %v89
    %853 = vmatpush2.msra.mxu0 %v88
    %854 = vmatprep.subr.mxu0 %v87
    %855 = vmatpush2.msra.mxu0 %v86
    %856 = vmatprep.subr.mxu0 %v85
    %857 = vmatpush2.msra.mxu0 %v84
    %858 = vmatprep.subr.mxu0 %v83
    %859 = vmatpush2.msra.mxu0 %v82
    %860 = vmatprep.subr.mxu0 %v81
    %861 = vmatpush2.msra.mxu0 %v80
    %862 = vmatprep.mubr.f32.mxu0 %v796
    %863 = vmatmul.mubr.f32.gmra.mxu0 %v785
    %v864 = vpop.f32.mrf.mxu0
    %v865 = vadd.f32 %v793, %v864
    %v866 = vpop.f32.mrf.mxu0
    %v867 = vadd.f32 %v794, %v866
    %868 = vdwg.mxu0
    %v869 = vtanh.pop %v865
    %v870 = vtanh.pop %v867
    %871 = vset.pattern.permute.xlu0 9
    %872 = vperm.xlu0 %871, %v12
    %v873 = vpop.permute.xlu0 %872
    %v875 = vmul.f32 %v873, %v24
    %v876 = vmul.f32 %v873, %v28
    %v877 = vadd.f32 %v875, %v282
    %v878 = vadd.f32 %v876, %v286
    %v880 = vsel %vm96, %v870, 0
    %882 = vmatprep.subr.mxu0 %v79
    %883 = vmatpush1.msra.mxu0 %v78
    %884 = vmatprep.subr.mxu0 %v77
    %885 = vmatpush1.msra.mxu0 %v76
    %886 = vmatprep.subr.mxu0 %v75
    %887 = vmatpush1.msra.mxu0 %v74
    %888 = vmatprep.subr.mxu0 %v73
    %889 = vmatpush1.msra.mxu0 %v72
    %890 = vmatprep.subr.mxu0 %v71
    %891 = vmatpush1.msra.mxu0 %v70
    %892 = vmatprep.subr.mxu0 %v69
    %893 = vmatpush1.msra.mxu0 %v68
    %894 = vmatprep.subr.mxu0 %v67
    %895 = vmatpush1.msra.mxu0 %v66
    %896 = vmatprep.subr.mxu0 %v65
    %897 = vmatpush1.msra.mxu0 %v64
    %898 = vmatprep.subr.mxu0 %v63
    %899 = vmatpush1.msra.mxu0 %v62
    %900 = vmatprep.subr.mxu0 %v61
    %901 = vmatpush1.msra.mxu0 %v60
    %902 = vmatprep.subr.mxu0 %v59
    %903 = vmatpush1.msra.mxu0 %v58
    %904 = vmatprep.subr.mxu0 %v57
    %905 = vmatpush1.msra.mxu0 %v56
    %906 = vmatprep.subr.mxu0 %v55
    %907 = vmatpush1.msra.mxu0 %v54
    %908 = vmatprep.subr.mxu0 %v53
    %909 = vmatpush1.msra.mxu0 %v52
    %910 = vmatprep.subr.mxu0 %v51
    %911 = vmatpush1.msra.mxu0 %v50
    %912 = vmatprep.subr.mxu0 %v49
    %913 = vmatpush1.msra.mxu0 %v48
    %914 = vmatprep.subr.mxu0 0.0
    %915 = vmatpush2.msra.mxu0 0.0
    %916 = vmatprep.subr.mxu0 0.0
    %917 = vmatpush2.msra.mxu0 0.0
    %918 = vmatprep.subr.mxu0 0.0
    %919 = vmatpush2.msra.mxu0 0.0
    %920 = vmatprep.subr.mxu0 0.0
    %921 = vmatpush2.msra.mxu0 0.0
    %922 = vmatprep.subr.mxu0 0.0
    %923 = vmatpush2.msra.mxu0 0.0
    %924 = vmatprep.subr.mxu0 0.0
    %925 = vmatpush2.msra.mxu0 0.0
    %926 = vmatprep.subr.mxu0 0.0
    %927 = vmatpush2.msra.mxu0 0.0
    %928 = vmatprep.subr.mxu0 0.0
    %929 = vmatpush2.msra.mxu0 0.0
    %930 = vmatprep.subr.mxu0 %v95
    %931 = vmatpush2.msra.mxu0 %v94
    %932 = vmatprep.subr.mxu0 %v93
    %933 = vmatpush2.msra.mxu0 %v92
    %934 = vmatprep.subr.mxu0 %v91
    %935 = vmatpush2.msra.mxu0 %v90
    %936 = vmatprep.subr.mxu0 %v89
    %937 = vmatpush2.msra.mxu0 %v88
    %938 = vmatprep.subr.mxu0 %v87
    %939 = vmatpush2.msra.mxu0 %v86
    %940 = vmatprep.subr.mxu0 %v85
    %941 = vmatpush2.msra.mxu0 %v84
    %942 = vmatprep.subr.mxu0 %v83
    %943 = vmatpush2.msra.mxu0 %v82
    %944 = vmatprep.subr.mxu0 %v81
    %945 = vmatpush2.msra.mxu0 %v80
    %946 = vmatprep.mubr.f32.mxu0 %v880
    %947 = vmatmul.mubr.f32.gmra.mxu0 %v869
    %v948 = vpop.f32.mrf.mxu0
    %v949 = vadd.f32 %v877, %v948
    %v950 = vpop.f32.mrf.mxu0
    %v951 = vadd.f32 %v878, %v950
    %952 = vdwg.mxu0
    %v953 = vtanh.pop %v949
    %v954 = vtanh.pop %v951
    %v955 = vld [vmem:[%s1 + $0x1a0] sm:$0xff]
    %v956 = vld [vmem:[%s1 + $0x1a8] sm:$0xff]
    %v957 = vld [vmem:[%s1 + $0x1b0] sm:$0xff]
    %v958 = vld [vmem:[%s1 + $0x1b8] sm:$0xff]
    %v959 = vld [vmem:[%s1 + $0x1c0] sm:$0xff]
    %v960 = vld [vmem:[%s1 + $0x1c8] sm:$0xff]
    %v961 = vld [vmem:[%s1 + $0x1d0] sm:$0xff]
    %v962 = vld [vmem:[%s1 + $0x1d8] sm:$0xff]
    %v963 = vld [vmem:[%s1 + $0x1e0] sm:$0xff]
    %v964 = vld [vmem:[%s1 + $0x1e8] sm:$0xff]
    %v965 = vld [vmem:[%s1 + $0x1f0] sm:$0xff]
    %v966 = vld [vmem:[%s1 + $0x1f8] sm:$0xff]
    %v967 = vld [vmem:[%s1 + $0x200] sm:$0xff]
    %v968 = vld [vmem:[%s1 + $0x208] sm:$0xff]
    %v969 = vld [vmem:[%s1 + $0x210] sm:$0xff]
    %v970 = vld [vmem:[%s1 + $0x218] sm:$0xff]
    %v971 = vld [vmem:[%s1 + $0x220] sm:$0xff]
    %v972 = vld [vmem:[%s1 + $0x228] sm:$0xff]
    %v973 = vld [vmem:[%s1 + $0x230] sm:$0xff]
    %v974 = vld [vmem:[%s1 + $0x238] sm:$0xff]
    %v975 = vld [vmem:[%s1 + $0x240] sm:$0xff]
    %v976 = vld [vmem:[%s1 + $0x248] sm:$0xff]
    %v977 = vld [vmem:[%s1 + $0x250] sm:$0xff]
    %v978 = vld [vmem:[%s1 + $0x258] sm:$0xff]
    %v979 = vld [vmem:[%s1 + $0x260] sm:$0xff]
    %v980 = vld [vmem:[%s1 + $0x268] sm:$0xff]
    %v981 = vld [vmem:[%s1 + $0x270] sm:$0xff]
    %v982 = vld [vmem:[%s1 + $0x278] sm:$0xff]
    %v983 = vld [vmem:[%s1 + $0x280] sm:$0xff]
    %v984 = vld [vmem:[%s1 + $0x288] sm:$0xff]
    %v985 = vld [vmem:[%s1 + $0x290] sm:$0xff]
    %v986 = vld [vmem:[%s1 + $0x298] sm:$0xff]
    %v987 = vld [vmem:[%s1 + $0x2a0] sm:$0xff]
    %v988 = vld [vmem:[%s1 + $0x2a8] sm:$0xff]
    %v989 = vld [vmem:[%s1 + $0x2b0] sm:$0xff]
    %v990 = vld [vmem:[%s1 + $0x2b8] sm:$0xff]
    %v991 = vld [vmem:[%s1 + $0x2c0] sm:$0xff]
    %v992 = vld [vmem:[%s1 + $0x2c8] sm:$0xff]
    %v993 = vld [vmem:[%s1 + $0x2d0] sm:$0xff]
    %v994 = vld [vmem:[%s1 + $0x2d8] sm:$0xff]
    %v995 = vld [vmem:[%s1 + $0x2e0] sm:$0xff]
    %v996 = vld [vmem:[%s1 + $0x2e8] sm:$0xff]
    %v997 = vld [vmem:[%s1 + $0x2f0] sm:$0xff]
    %v998 = vld [vmem:[%s1 + $0x2f8] sm:$0xff]
    %v999 = vld [vmem:[%s1 + $0x300] sm:$0xff]
    %v1000 = vld [vmem:[%s1 + $0x308] sm:$0xff]
    %v1001 = vld [vmem:[%s1 + $0x310] sm:$0xff]
    %v1002 = vld [vmem:[%s1 + $0x318] sm:$0xff]
    %s1003 = scalar_lea.vmem %s1, 800
    %v1004 = vld [vmem:[%s1003] ss:$8 sm:$0x3]
    %v1006 = vlaneseq
    %v1007 = vshrl.u32 %v1006, 7
    %v1008 = vsub.s32 0, %v1007
    %v1009 = vrot.slane %v1004, %v1008
    %v1012 = vsel %vm96, %v954, 0
    %1014 = vmatprep.subr.mxu0 %v986
    %1015 = vmatpush1.msra.mxu0 %v985
    %1016 = vmatprep.subr.mxu0 %v984
    %1017 = vmatpush1.msra.mxu0 %v983
    %1018 = vmatprep.subr.mxu0 %v982
    %1019 = vmatpush1.msra.mxu0 %v981
    %1020 = vmatprep.subr.mxu0 %v980
    %1021 = vmatpush1.msra.mxu0 %v979
    %1022 = vmatprep.subr.mxu0 %v978
    %1023 = vmatpush1.msra.mxu0 %v977
    %1024 = vmatprep.subr.mxu0 %v976
    %1025 = vmatpush1.msra.mxu0 %v975
    %1026 = vmatprep.subr.mxu0 %v974
    %1027 = vmatpush1.msra.mxu0 %v973
    %1028 = vmatprep.subr.mxu0 %v972
    %1029 = vmatpush1.msra.mxu0 %v971
    %1030 = vmatprep.subr.mxu0 %v970
    %1031 = vmatpush1.msra.mxu0 %v969
    %1032 = vmatprep.subr.mxu0 %v968
    %1033 = vmatpush1.msra.mxu0 %v967
    %1034 = vmatprep.subr.mxu0 %v966
    %1035 = vmatpush1.msra.mxu0 %v965
    %1036 = vmatprep.subr.mxu0 %v964
    %1037 = vmatpush1.msra.mxu0 %v963
    %1038 = vmatprep.subr.mxu0 %v962
    %1039 = vmatpush1.msra.mxu0 %v961
    %1040 = vmatprep.subr.mxu0 %v960
    %1041 = vmatpush1.msra.mxu0 %v959
    %1042 = vmatprep.subr.mxu0 %v958
    %1043 = vmatpush1.msra.mxu0 %v957
    %1044 = vmatprep.subr.mxu0 %v956
    %1045 = vmatpush1.msra.mxu0 %v955
    %1046 = vmatprep.subr.mxu0 0.0
    %1047 = vmatpush2.msra.mxu0 0.0
    %1048 = vmatprep.subr.mxu0 0.0
    %1049 = vmatpush2.msra.mxu0 0.0
    %1050 = vmatprep.subr.mxu0 0.0
    %1051 = vmatpush2.msra.mxu0 0.0
    %1052 = vmatprep.subr.mxu0 0.0
    %1053 = vmatpush2.msra.mxu0 0.0
    %1054 = vmatprep.subr.mxu0 0.0
    %1055 = vmatpush2.msra.mxu0 0.0
    %1056 = vmatprep.subr.mxu0 0.0
    %1057 = vmatpush2.msra.mxu0 0.0
    %1058 = vmatprep.subr.mxu0 0.0
    %1059 = vmatpush2.msra.mxu0 0.0
    %1060 = vmatprep.subr.mxu0 0.0
    %1061 = vmatpush2.msra.mxu0 0.0
    %1062 = vmatprep.subr.mxu0 %v1002
    %1063 = vmatpush2.msra.mxu0 %v1001
    %1064 = vmatprep.subr.mxu0 %v1000
    %1065 = vmatpush2.msra.mxu0 %v999
    %1066 = vmatprep.subr.mxu0 %v998
    %1067 = vmatpush2.msra.mxu0 %v997
    %1068 = vmatprep.subr.mxu0 %v996
    %1069 = vmatpush2.msra.mxu0 %v995
    %1070 = vmatprep.subr.mxu0 %v994
    %1071 = vmatpush2.msra.mxu0 %v993
    %1072 = vmatprep.subr.mxu0 %v992
    %1073 = vmatpush2.msra.mxu0 %v991
    %1074 = vmatprep.subr.mxu0 %v990
    %1075 = vmatpush2.msra.mxu0 %v989
    %1076 = vmatprep.subr.mxu0 %v988
    %1077 = vmatpush2.msra.mxu0 %v987
    %1078 = vmatprep.mubr.f32.mxu0 %v1012
    %1079 = vmatmul.mubr.f32.gmra.mxu0 %v953
    %v1080 = vpop.f32.mrf.mxu0
    %v1081 = vadd.f32 %v1009, %v1080
    %v1082 = vpop.f32.mrf.mxu0
    %1083 = vdwg.mxu0
    %vm1084 = vcmask 74752
    %1085 = vst.msk [vmem:[#allocation2] sm:$0x3] %vm1084, %v1081
    // Predicated region
    $region10: #{rnn_model2_forward.1} parent=1 // pred_check
      _
    $region11: #{rnn_model2_forward.1} parent=1 // pred_check_branch
      %1087 = sbr.rel (0) target = $region13
    $region12: #{rnn_model2_forward.1} parent=1 // pred_region
      %s1089 = ssub.s32 32, 32
      %1090 = vsyncadd [#allocation3], %s1089
      %s1092 = sshll.u32 [#allocation2], 4
      %s1093 = int_to_ptr.vmem [resolvable:$true] %s1092
      %1095 = dma.vmem_to_hbm [thread:$0]  %s1093, 32, %s2, [#allocation3]
    $region13: #{rnn_model2_forward.1} parent=1 // pred_fallthru
      _
    // Predicated region
    $region14: #{rnn_model2_forward.1} parent=1 // pred_check
      _
    $region15: #{rnn_model2_forward.1} parent=1 // pred_check_branch
      %1097 = sbr.rel (0) target = $region17
    $region16: #{rnn_model2_forward.1} parent=1 // pred_region
      %1098 = dma.done [#allocation3], 32
    $region17: #{rnn_model2_forward.1} parent=1 // pred_fallthru
      _
    %1099 = vsyncpa [#allocation3], 1

</llo_original>
